<compile_context>
chip_gen: v5e
topology: v5e:2x2
jax: 0.10.0
libtpu: 0.0.40
codegen_flags: <defaults>
</compile_context>

<pallas_src>
import math
import functools

import jax
import jax.numpy as jnp
from jax import lax
from jax.experimental import pallas as pl
from jax.experimental.pallas import tpu as pltpu


# ----------------------------------------------------------------------------
# Pallas kernel: one time-chunk of the LSTM recurrence + batched MDN head.
# ----------------------------------------------------------------------------
def _mdnrnn_kernel(t_valid, time_chunk, needs_mask, num_chunks,
                   x_ref, wih_ref, whh_ref, b_ref, wmdn_ref, bmdn_ref,
                   h0_ref, c0_ref,
                   mdn_ref, hT_ref, cT_ref,
                   xg_scr, hslab_scr):
    chunk = pl.program_id(0)
    B, H = h0_ref.shape          # B is the sublane-padded batch
    Tc = time_chunk

    # hT/cT are VMEM-resident output blocks (constant index_map) used directly
    # as the persistent recurrent state across the serial chunk axis.
    @pl.when(chunk == 0)
    def _():
        hT_ref[...] = h0_ref[...]
        cT_ref[...] = c0_ref[...]

    # Batched input projection for the whole chunk (bias folded in): one
    # (Tc*B, D_in) x (D_in, 4H) MXU matmul, off the serial recurrence path.
    xg_scr[...] = (
        jnp.dot(x_ref[...], wih_ref[...], preferred_element_type=jnp.float32)
        + b_ref[...])

    base_t = chunk * Tc
    whh = whh_ref[...]                      # hoisted loop constant (H, 4H)
    unroll = True if Tc <= 64 else 16       # deep unroll: ~2 live vregs/step

    def run_steps(mask_tail):
        def step(t, carry):
            h_prev, c_prev = carry
            row = pl.multiple_of(t * B, 8)  # sublane-aligned slice start
            # Only matmul on the serial critical path: (B, H) x (H, 4H).
            gates = (xg_scr[pl.ds(row, B), :]
                     + jnp.dot(h_prev, whh,
                               preferred_element_type=jnp.float32))
            # Two full-vreg EUP passes instead of four lane-sliced ones.
            s = jax.nn.sigmoid(gates)
            tg = jnp.tanh(gates)
            i_g = s[:, 0 * H:1 * H]
            f_g = s[:, 1 * H:2 * H]
            o_g = s[:, 3 * H:4 * H]
            g_g = tg[:, 2 * H:3 * H]
            c_new = f_g * c_prev + i_g * g_g
            h_new = o_g * jnp.tanh(c_new)
            if mask_tail:   # freeze state on padded timesteps (last chunk only)
                valid = (base_t + t) < t_valid
                h_new = jnp.where(valid, h_new, h_prev)
                c_new = jnp.where(valid, c_new, c_prev)
            hslab_scr[pl.ds(row, B), :] = h_new
            return (h_new, c_new)

        h_fin, c_fin = lax.fori_loop(0, Tc, step,
                                     (hT_ref[...], cT_ref[...]),
                                     unroll=unroll)
        hT_ref[...] = h_fin
        cT_ref[...] = c_fin

    if needs_mask:
        # Pay the tail-mask compare/selects only on the final chunk.
        @pl.when(chunk == num_chunks - 1)
        def _():
            run_steps(True)

        @pl.when(chunk != num_chunks - 1)
        def _():
            run_steps(False)
    else:
        run_steps(False)

    # Batched MDN head for the whole chunk: (Tc*B, H) x (H, P_pad) with a
    # lane-dense (128-multiple) output.
    mdn_ref[...] = (
        jnp.dot(hslab_scr[...], wmdn_ref[...],
                preferred_element_type=jnp.float32)
        + bmdn_ref[...])


# ----------------------------------------------------------------------------
# Wrapper: matches MDNRNN.forward(z_seq, a_seq, h_c=None, temperature=1.0)
# ----------------------------------------------------------------------------
def mdnrnn_forward(params, z_seq, a_seq, h_c=None, temperature=1.0,
                   max_time_chunk=64):
    z_dim = params["z_dim"]
    num_mixtures = params["num_mixtures"]
    H = params["hidden_dim"]

    B, T, _ = z_seq.shape
    B_pad = max(8, ((B + 7) // 8) * 8)          # sublane-aligned batch
    inp = jnp.concatenate([z_seq, a_seq], axis=-1).astype(jnp.float32)
    D_in = inp.shape[-1]
    P = (2 * z_dim + 1) * num_mixtures
    P_pad = ((P + 127) // 128) * 128            # lane-dense MDN output width

    inp_tm = jnp.transpose(inp, (1, 0, 2))      # (T, B, D_in), time-major
    if B_pad != B:
        inp_tm = jnp.pad(inp_tm, ((0, 0), (0, B_pad - B), (0, 0)))

    # ---- generation-aware chunk sizing / VMEM budget ----
    def est_vmem(tc):
        blk = tc * B_pad
        by = 0
        by += 2 * blk * D_in * 4                               # x (dbl-buf)
        by += 2 * blk * P_pad * 4                              # mdn out
        by += 2 * (D_in * 4 * H + H * 4 * H + 4 * H
                   + H * P_pad + P_pad) * 4                    # weights
        by += 2 * 4 * B_pad * H * 4                            # h0,c0,hT,cT
        by += blk * 4 * H * 4 + blk * H * 4                    # scratch slabs
        return by

    try:
        vmem_cap = int(pltpu.get_tpu_info().vmem_capacity_bytes)
    except Exception:
        vmem_cap = 64 * 2 ** 20                                # v7x-safe fallback
    while max_time_chunk > 8 and est_vmem(max_time_chunk) > vmem_cap // 2:
        max_time_chunk //= 2

    if T <= max_time_chunk:
        Tc, num_chunks, T_pad = T, 1, T
    else:
        Tc = max_time_chunk
        num_chunks = pl.cdiv(T, Tc)
        T_pad = num_chunks * Tc
        inp_tm = jnp.pad(inp_tm, ((0, T_pad - T), (0, 0), (0, 0)))

    vmem_limit = int(min(max(2 * est_vmem(Tc) + (4 << 20), 32 << 20), vmem_cap))

    x2 = inp_tm.reshape(T_pad * B_pad, D_in)    # flattened so kernel stays 2D

    if h_c is None:
        h0 = jnp.zeros((B_pad, H), jnp.float32)
        c0 = jnp.zeros((B_pad, H), jnp.float32)
    else:
        h0 = h_c[0][0].astype(jnp.float32)      # (1,B,H) -> (B,H)
        c0 = h_c[1][0].astype(jnp.float32)
        if B_pad != B:
            h0 = jnp.pad(h0, ((0, B_pad - B), (0, 0)))
            c0 = jnp.pad(c0, ((0, B_pad - B), (0, 0)))

    w_ih = params["w_ih"].astype(jnp.float32)       # (D_in, 4H)
    w_hh = params["w_hh"].astype(jnp.float32)       # (H, 4H)
    b_lstm = params["b_lstm"].astype(jnp.float32)   # (1, 4H)  (b_ih + b_hh)
    w_mdn = params["w_mdn"].astype(jnp.float32)     # (H, P)
    b_mdn = params["b_mdn"].astype(jnp.float32)     # (1, P)
    w_mdn_pad = jnp.pad(w_mdn, ((0, 0), (0, P_pad - P)))
    b_mdn_pad = jnp.pad(b_mdn, ((0, 0), (0, P_pad - P)))

    kernel = functools.partial(_mdnrnn_kernel, T, Tc, T_pad != T, num_chunks)

    grid_spec = pltpu.PrefetchScalarGridSpec(
        num_scalar_prefetch=0,
        grid=(num_chunks,),
        in_specs=[
            pl.BlockSpec((Tc * B_pad, D_in), lambda c: (c, 0)),   # x (flattened)
            pl.BlockSpec((D_in, 4 * H), lambda c: (0, 0)),        # W_ih
            pl.BlockSpec((H, 4 * H), lambda c: (0, 0)),           # W_hh
            pl.BlockSpec((1, 4 * H), lambda c: (0, 0)),           # b_lstm
            pl.BlockSpec((H, P_pad), lambda c: (0, 0)),           # W_mdn (padded)
            pl.BlockSpec((1, P_pad), lambda c: (0, 0)),           # b_mdn (padded)
            pl.BlockSpec((B_pad, H), lambda c: (0, 0)),           # h0
            pl.BlockSpec((B_pad, H), lambda c: (0, 0)),           # c0
        ],
        out_specs=[
            pl.BlockSpec((Tc * B_pad, P_pad), lambda c: (c, 0)),  # MDN raw
            pl.BlockSpec((B_pad, H), lambda c: (0, 0)),           # final h (resident)
            pl.BlockSpec((B_pad, H), lambda c: (0, 0)),           # final c (resident)
        ],
        scratch_shapes=[
            pltpu.VMEM((Tc * B_pad, 4 * H), jnp.float32),         # x @ W_ih + b slab
            pltpu.VMEM((Tc * B_pad, H), jnp.float32),             # h slab (MDN input)
        ],
    )

    out_shape = (
        jax.ShapeDtypeStruct((T_pad * B_pad, P_pad), jnp.float32),
        jax.ShapeDtypeStruct((B_pad, H), jnp.float32),
        jax.ShapeDtypeStruct((B_pad, H), jnp.float32),
    )

    mdn2, hT, cT = pl.pallas_call(
        kernel,
        out_shape=out_shape,
        grid_spec=grid_spec,
        compiler_params=pltpu.CompilerParams(
            dimension_semantics=("arbitrary",),    # serial recurrence over chunks
            vmem_limit_bytes=vmem_limit),
    )(x2, w_ih, w_hh, b_lstm, w_mdn_pad, b_mdn_pad, h0, c0)

    # --- MDN head post-processing (glue, matches MDNOutput.forward exactly) ---
    raw = mdn2.reshape(T_pad, B_pad, P_pad)[:T, :B, :P]           # (T, B, P)
    raw = jnp.transpose(raw, (1, 0, 2)).reshape(B, T, num_mixtures,
                                                2 * z_dim + 1)
    pi = jax.nn.softmax(raw[..., 0] / temperature, axis=-1)       # (B, T, M)
    mu = raw[..., 1:1 + z_dim]                                    # (B, T, M, Z)
    sigma = jnp.exp(raw[..., 1 + z_dim:1 + 2 * z_dim]) * math.sqrt(temperature)

    hT = hT[:B]
    cT = cT[:B]
    return pi, mu, sigma, (hT[None], cT[None])   # torch LSTM (1,B,H) convention


# ----------------------------------------------------------------------------
# Deterministic parameter init (matches shapes of the PyTorch module).
# ----------------------------------------------------------------------------
def init_params(key, z_dim, action_dim, hidden_dim=32, num_mixtures=5):
    D_in = z_dim + action_dim
    H = hidden_dim
    P = (2 * z_dim + 1) * num_mixtures
    k = 1.0 / math.sqrt(H)
    keys = jax.random.split(key, 6)
    u = lambda kk, shape: jax.random.uniform(kk, shape, jnp.float32, -k, k)
    # torch: weight_ih_l0 (4H, D_in), weight_hh_l0 (4H, H) -> store transposed
    w_ih = u(keys[0], (4 * H, D_in)).T
    w_hh = u(keys[1], (4 * H, H)).T
    b_lstm = (u(keys[2], (4 * H,)) + u(keys[3], (4 * H,)))[None, :]   # b_ih + b_hh
    # torch: fc.weight (P, H), fc.bias (P,) -> store transposed
    w_mdn = u(keys[4], (P, H)).T
    b_mdn = u(keys[5], (P,))[None, :]
    return {
        "z_dim": z_dim, "action_dim": action_dim,
        "hidden_dim": H, "num_mixtures": num_mixtures,
        "w_ih": jnp.asarray(w_ih), "w_hh": jnp.asarray(w_hh),
        "b_lstm": jnp.asarray(b_lstm),
        "w_mdn": jnp.asarray(w_mdn), "b_mdn": jnp.asarray(b_mdn),
    }


# ----------------------------------------------------------------------------
# Pure-JAX reference (lax.scan LSTM) for correctness checking.
# ----------------------------------------------------------------------------
def mdnrnn_reference(params, z_seq, a_seq, h_c=None, temperature=1.0):
    z_dim = params["z_dim"]
    M = params["num_mixtures"]
    H = params["hidden_dim"]
    B, T, _ = z_seq.shape
    inp = jnp.concatenate([z_seq, a_seq], axis=-1)
    inp_tm = jnp.transpose(inp, (1, 0, 2))
    if h_c is None:
        h0 = jnp.zeros((B, H), jnp.float32)
        c0 = jnp.zeros((B, H), jnp.float32)
    else:
        h0, c0 = h_c[0][0], h_c[1][0]

    w_ih, w_hh, b = params["w_ih"], params["w_hh"], params["b_lstm"]

    def step(carry, x_t):
        h, c = carry
        gates = x_t @ w_ih + h @ w_hh + b[0]
        i_g = jax.nn.sigmoid(gates[:, 0 * H:1 * H])
        f_g = jax.nn.sigmoid(gates[:, 1 * H:2 * H])
        g_g = jnp.tanh(gates[:, 2 * H:3 * H])
        o_g = jax.nn.sigmoid(gates[:, 3 * H:4 * H])
        c_new = f_g * c + i_g * g_g
        h_new = o_g * jnp.tanh(c_new)
        return (h_new, c_new), h_new

    (hT, cT), outs = lax.scan(step, (h0, c0), inp_tm)
    out = jnp.transpose(outs, (1, 0, 2))                      # (B, T, H)
    raw = out @ params["w_mdn"] + params["b_mdn"][0]
    raw = raw.reshape(B, T, M, 2 * z_dim + 1)
    pi = jax.nn.softmax(raw[..., 0] / temperature, axis=-1)
    mu = raw[..., 1:1 + z_dim]
    sigma = jnp.exp(raw[..., 1 + z_dim:1 + 2 * z_dim]) * math.sqrt(temperature)
    return pi, mu, sigma, (hT[None], cT[None])


if __name__ == "__main__":
    # Small, module-consistent shapes.
    B, T = 2, 8
    z_dim, action_dim = 8, 4
    hidden_dim, num_mixtures = 32, 5

    key = jax.random.PRNGKey(0)
    kp, kz, ka, kz2, ka2 = jax.random.split(key, 5)
    params = init_params(kp, z_dim, action_dim, hidden_dim, num_mixtures)
    z_seq = jax.random.normal(kz, (B, T, z_dim), jnp.float32)
    a_seq = jax.random.normal(ka, (B, T, action_dim), jnp.float32)

    # --- single-chunk path (grid=(1,), whole sequence in one kernel step) ---
    fwd = functools.partial(mdnrnn_forward, params)
    pi, mu, sigma, (h, c) = jax.block_until_ready(fwd(z_seq, a_seq))

    pi_r, mu_r, sigma_r, (h_r, c_r) = mdnrnn_reference(params, z_seq, a_seq)
    assert pi.shape == (B, T, num_mixtures)
    assert mu.shape == (B, T, num_mixtures, z_dim)
    assert sigma.shape == (B, T, num_mixtures, z_dim)
    assert h.shape == (1, B, hidden_dim) and c.shape == (1, B, hidden_dim)
    for a, b_ in ((pi, pi_r), (mu, mu_r), (sigma, sigma_r), (h, h_r), (c, c_r)):
        assert jnp.allclose(a, b_, atol=1e-4, rtol=1e-4), "mismatch vs reference"

    # --- multi-chunk path (T=12, chunk=8 -> 2 chunks, padded + masked tail) ---
    T2 = 12
    z2 = jax.random.normal(kz2, (B, T2, z_dim), jnp.float32)
    a2 = jax.random.normal(ka2, (B, T2, action_dim), jnp.float32)
    pi2, mu2, sg2, (h2, c2) = jax.block_until_ready(
        mdnrnn_forward(params, z2, a2, max_time_chunk=8))
    pi2r, mu2r, sg2r, (h2r, c2r) = mdnrnn_reference(params, z2, a2)
    for a, b_ in ((pi2, pi2r), (mu2, mu2r), (sg2, sg2r), (h2, h2r), (c2, c2r)):
        assert jnp.allclose(a, b_, atol=1e-4, rtol=1e-4), "mismatch (chunked)"

    # --- nonzero initial state path ---
    h0 = jax.random.normal(kz2, (1, B, hidden_dim), jnp.float32) * 0.1
    c0 = jax.random.normal(ka2, (1, B, hidden_dim), jnp.float32) * 0.1
    pi3, mu3, sg3, (h3, c3) = jax.block_until_ready(
        mdnrnn_forward(params, z_seq, a_seq, h_c=(h0, c0), temperature=1.3))
    pi3r, mu3r, sg3r, (h3r, c3r) = mdnrnn_reference(params, z_seq, a_seq,
                                                    h_c=(h0, c0),
                                                    temperature=1.3)
    for a, b_ in ((pi3, pi3r), (mu3, mu3r), (sg3, sg3r), (h3, h3r), (c3, c3r)):
        assert jnp.allclose(a, b_, atol=1e-4, rtol=1e-4), "mismatch (h_c/temp)"

    print("KERNEL_OK")
</pallas_src>

<mosaic_0001>
module attributes {stable_mosaic.version = 11 : i64} {
  func.func @_mdnrnn_kernel(%arg0: i32, %arg1: memref<64x12xf32, #tpu.memory_space<vmem>>, %arg2: memref<12x128xf32, #tpu.memory_space<vmem>>, %arg3: memref<32x128xf32, #tpu.memory_space<vmem>>, %arg4: memref<1x128xf32, #tpu.memory_space<vmem>>, %arg5: memref<32x128xf32, #tpu.memory_space<vmem>>, %arg6: memref<1x128xf32, #tpu.memory_space<vmem>>, %arg7: memref<8x32xf32, #tpu.memory_space<vmem>>, %arg8: memref<8x32xf32, #tpu.memory_space<vmem>>, %arg9: memref<64x128xf32, #tpu.memory_space<vmem>>, %arg10: memref<8x32xf32, #tpu.memory_space<vmem>>, %arg11: memref<8x32xf32, #tpu.memory_space<vmem>>, %arg12: memref<64x128xf32, #tpu.memory_space<vmem>>, %arg13: memref<64x32xf32, #tpu.memory_space<vmem>>) attributes {dimension_semantics = [#tpu.dimension_semantics<arbitrary>], iteration_bounds = array<i64: 1>, scalar_prefetch = 0 : i64, scratch_operands = 2 : i64, tpu.core_type = #tpu.core_type<tc>, window_params = [{transform_indices = @transform_0, window_bounds = array<i64: 64, 12>}, {pipeline_mode = #tpu.pipeline_mode<synchronous>, transform_indices = @transform_1, window_bounds = array<i64: 12, 128>}, {pipeline_mode = #tpu.pipeline_mode<synchronous>, transform_indices = @transform_2, window_bounds = array<i64: 32, 128>}, {pipeline_mode = #tpu.pipeline_mode<synchronous>, transform_indices = @transform_3, window_bounds = array<i64: 1, 128>}, {pipeline_mode = #tpu.pipeline_mode<synchronous>, transform_indices = @transform_4, window_bounds = array<i64: 32, 128>}, {pipeline_mode = #tpu.pipeline_mode<synchronous>, transform_indices = @transform_5, window_bounds = array<i64: 1, 128>}, {pipeline_mode = #tpu.pipeline_mode<synchronous>, transform_indices = @transform_6, window_bounds = array<i64: 8, 32>}, {pipeline_mode = #tpu.pipeline_mode<synchronous>, transform_indices = @transform_7, window_bounds = array<i64: 8, 32>}, {transform_indices = @transform_8, window_bounds = array<i64: 64, 128>}, {pipeline_mode = #tpu.pipeline_mode<synchronous>, transform_indices = @transform_9, window_bounds = array<i64: 8, 32>}, {pipeline_mode = #tpu.pipeline_mode<synchronous>, transform_indices = @transform_10, window_bounds = array<i64: 8, 32>}]} {
    %c0_i32 = arith.constant 0 : i32
    %0 = arith.cmpi eq, %arg0, %c0_i32 : i32
    %1 = arith.extui %0 : i1 to i32
    %c0_i32_0 = arith.constant 0 : i32
    %2 = arith.cmpi ne, %1, %c0_i32_0 : i32
    scf.if %2 {
      %c0_68 = arith.constant 0 : index
      %c0_69 = arith.constant 0 : index
      %206 = vector.load %arg7[%c0_68, %c0_69] : memref<8x32xf32, #tpu.memory_space<vmem>>, vector<8x32xf32>
      %c0_70 = arith.constant 0 : index
      %c0_71 = arith.constant 0 : index
      %207 = vector.load %arg10[%c0_70, %c0_71] : memref<8x32xf32, #tpu.memory_space<vmem>>, vector<8x32xf32>
      tpu.vector_store %arg10[%c0_70, %c0_71], %206 {strides = array<i32>} : memref<8x32xf32, #tpu.memory_space<vmem>>, vector<8x32xf32>,
      %c0_72 = arith.constant 0 : index
      %c0_73 = arith.constant 0 : index
      %208 = vector.load %arg8[%c0_72, %c0_73] : memref<8x32xf32, #tpu.memory_space<vmem>>, vector<8x32xf32>
      %c0_74 = arith.constant 0 : index
      %c0_75 = arith.constant 0 : index
      %209 = vector.load %arg11[%c0_74, %c0_75] : memref<8x32xf32, #tpu.memory_space<vmem>>, vector<8x32xf32>
      tpu.vector_store %arg11[%c0_74, %c0_75], %208 {strides = array<i32>} : memref<8x32xf32, #tpu.memory_space<vmem>>, vector<8x32xf32>,
    } else {
    }
    %c0 = arith.constant 0 : index
    %c0_1 = arith.constant 0 : index
    %3 = vector.load %arg1[%c0, %c0_1] : memref<64x12xf32, #tpu.memory_space<vmem>>, vector<64x12xf32>
    %c0_2 = arith.constant 0 : index
    %c0_3 = arith.constant 0 : index
    %4 = vector.load %arg2[%c0_2, %c0_3] : memref<12x128xf32, #tpu.memory_space<vmem>>, vector<12x128xf32>
    %cst = arith.constant dense<0.000000e+00> : vector<64x128xf32>
    %5 = tpu.matmul %3, %4, %cst {dimension_numbers = #tpu.dot_dimension_numbers<[1], [0], [0], [1], [0, 0, 1, 1], [], []>} : vector<64x12xf32>, vector<12x128xf32>, vector<64x128xf32> -> vector<64x128xf32>
    %c0_4 = arith.constant 0 : index
    %c0_5 = arith.constant 0 : index
    %6 = vector.load %arg4[%c0_4, %c0_5] : memref<1x128xf32, #tpu.memory_space<vmem>>, vector<1x128xf32>
    %7 = vector.broadcast %6 : vector<1x128xf32> to vector<64x128xf32>
    %8 = arith.addf %5, %7 : vector<64x128xf32>
    %c0_6 = arith.constant 0 : index
    %c0_7 = arith.constant 0 : index
    %9 = vector.load %arg12[%c0_6, %c0_7] : memref<64x128xf32, #tpu.memory_space<vmem>>, vector<64x128xf32>
    tpu.vector_store %arg12[%c0_6, %c0_7], %8 {strides = array<i32>} : memref<64x128xf32, #tpu.memory_space<vmem>>, vector<64x128xf32>,
    %c0_8 = arith.constant 0 : index
    %c0_9 = arith.constant 0 : index
    %10 = vector.load %arg3[%c0_8, %c0_9] : memref<32x128xf32, #tpu.memory_space<vmem>>, vector<32x128xf32>
    %c0_10 = arith.constant 0 : index
    %c0_11 = arith.constant 0 : index
    %11 = vector.load %arg10[%c0_10, %c0_11] : memref<8x32xf32, #tpu.memory_space<vmem>>, vector<8x32xf32>
    %c0_12 = arith.constant 0 : index
    %c0_13 = arith.constant 0 : index
    %12 = vector.load %arg11[%c0_12, %c0_13] : memref<8x32xf32, #tpu.memory_space<vmem>>, vector<8x32xf32>
    %c0_i32_14 = arith.constant 0 : i32
    %c8_i32 = arith.constant 8 : i32
    %13 = arith.muli %c0_i32_14, %c8_i32 : i32
    %14 = tpu.assume_multiple %13, 8 : i32
    %15 = arith.index_cast %14 : i32 to index
    %c0_15 = arith.constant 0 : index
    %16 = vector.load %arg12[%15, %c0_15] : memref<64x128xf32, #tpu.memory_space<vmem>>, vector<8x128xf32>
    %cst_16 = arith.constant dense<0.000000e+00> : vector<8x128xf32>
    %17 = tpu.matmul %11, %10, %cst_16 {dimension_numbers = #tpu.dot_dimension_numbers<[1], [0], [0], [1], [0, 0, 1, 1], [], []>} : vector<8x32xf32>, vector<32x128xf32>, vector<8x128xf32> -> vector<8x128xf32>
    %18 = arith.addf %16, %17 : vector<8x128xf32>
    %19 = arith.negf %18 : vector<8x128xf32>
    %20 = math.exp %19 : vector<8x128xf32>
    %cst_17 = arith.constant 1.000000e+00 : f32
    %21 = vector.broadcast %cst_17 : f32 to vector<8x128xf32>
    %22 = arith.addf %21, %20 : vector<8x128xf32>
    %23 = arith.divf %21, %22 : vector<8x128xf32>
    %24 = math.tanh %18 : vector<8x128xf32>
    %25 = vector.extract_strided_slice %23 {offsets = [0, 0], sizes = [8, 32], strides = [1, 1]} : vector<8x128xf32> to vector<8x32xf32>
    %26 = vector.extract_strided_slice %23 {offsets = [0, 32], sizes = [8, 32], strides = [1, 1]} : vector<8x128xf32> to vector<8x32xf32>
    %27 = vector.extract_strided_slice %23 {offsets = [0, 96], sizes = [8, 32], strides = [1, 1]} : vector<8x128xf32> to vector<8x32xf32>
    %28 = vector.extract_strided_slice %24 {offsets = [0, 64], sizes = [8, 32], strides = [1, 1]} : vector<8x128xf32> to vector<8x32xf32>
    %29 = arith.mulf %26, %12 : vector<8x32xf32>
    %30 = arith.mulf %25, %28 : vector<8x32xf32>
    %31 = arith.addf %29, %30 : vector<8x32xf32>
    %32 = math.tanh %31 : vector<8x32xf32>
    %33 = arith.mulf %27, %32 : vector<8x32xf32>
    %34 = arith.index_cast %14 : i32 to index
    %c0_18 = arith.constant 0 : index
    %35 = vector.load %arg13[%34, %c0_18] : memref<64x32xf32, #tpu.memory_space<vmem>>, vector<8x32xf32>
    tpu.vector_store %arg13[%34, %c0_18], %33 {strides = array<i32>} : memref<64x32xf32, #tpu.memory_space<vmem>>, vector<8x32xf32>,
    %c1_i32 = arith.constant 1 : i32
    %c8_i32_19 = arith.constant 8 : i32
    %36 = arith.muli %c1_i32, %c8_i32_19 : i32
    %37 = tpu.assume_multiple %36, 8 : i32
    %38 = arith.index_cast %37 : i32 to index
    %c0_20 = arith.constant 0 : index
    %39 = vector.load %arg12[%38, %c0_20] : memref<64x128xf32, #tpu.memory_space<vmem>>, vector<8x128xf32>
    %cst_21 = arith.constant dense<0.000000e+00> : vector<8x128xf32>
    %40 = tpu.matmul %33, %10, %cst_21 {dimension_numbers = #tpu.dot_dimension_numbers<[1], [0], [0], [1], [0, 0, 1, 1], [], []>} : vector<8x32xf32>, vector<32x128xf32>, vector<8x128xf32> -> vector<8x128xf32>
    %41 = arith.addf %39, %40 : vector<8x128xf32>
    %42 = arith.negf %41 : vector<8x128xf32>
    %43 = math.exp %42 : vector<8x128xf32>
    %cst_22 = arith.constant 1.000000e+00 : f32
    %44 = vector.broadcast %cst_22 : f32 to vector<8x128xf32>
    %45 = arith.addf %44, %43 : vector<8x128xf32>
    %46 = arith.divf %44, %45 : vector<8x128xf32>
    %47 = math.tanh %41 : vector<8x128xf32>
    %48 = vector.extract_strided_slice %46 {offsets = [0, 0], sizes = [8, 32], strides = [1, 1]} : vector<8x128xf32> to vector<8x32xf32>
    %49 = vector.extract_strided_slice %46 {offsets = [0, 32], sizes = [8, 32], strides = [1, 1]} : vector<8x128xf32> to vector<8x32xf32>
    %50 = vector.extract_strided_slice %46 {offsets = [0, 96], sizes = [8, 32], strides = [1, 1]} : vector<8x128xf32> to vector<8x32xf32>
    %51 = vector.extract_strided_slice %47 {offsets = [0, 64], sizes = [8, 32], strides = [1, 1]} : vector<8x128xf32> to vector<8x32xf32>
    %52 = arith.mulf %49, %31 : vector<8x32xf32>
    %53 = arith.mulf %48, %51 : vector<8x32xf32>
    %54 = arith.addf %52, %53 : vector<8x32xf32>
    %55 = math.tanh %54 : vector<8x32xf32>
    %56 = arith.mulf %50, %55 : vector<8x32xf32>
    %57 = arith.index_cast %37 : i32 to index
    %c0_23 = arith.constant 0 : index
    %58 = vector.load %arg13[%57, %c0_23] : memref<64x32xf32, #tpu.memory_space<vmem>>, vector<8x32xf32>
    tpu.vector_store %arg13[%57, %c0_23], %56 {strides = array<i32>} : memref<64x32xf32, #tpu.memory_space<vmem>>, vector<8x32xf32>,
    %c2_i32 = arith.constant 2 : i32
    %c8_i32_24 = arith.constant 8 : i32
    %59 = arith.muli %c2_i32, %c8_i32_24 : i32
    %60 = tpu.assume_multiple %59, 8 : i32
    %61 = arith.index_cast %60 : i32 to index
    %c0_25 = arith.constant 0 : index
    %62 = vector.load %arg12[%61, %c0_25] : memref<64x128xf32, #tpu.memory_space<vmem>>, vector<8x128xf32>
    %cst_26 = arith.constant dense<0.000000e+00> : vector<8x128xf32>
    %63 = tpu.matmul %56, %10, %cst_26 {dimension_numbers = #tpu.dot_dimension_numbers<[1], [0], [0], [1], [0, 0, 1, 1], [], []>} : vector<8x32xf32>, vector<32x128xf32>, vector<8x128xf32> -> vector<8x128xf32>
    %64 = arith.addf %62, %63 : vector<8x128xf32>
    %65 = arith.negf %64 : vector<8x128xf32>
    %66 = math.exp %65 : vector<8x128xf32>
    %cst_27 = arith.constant 1.000000e+00 : f32
    %67 = vector.broadcast %cst_27 : f32 to vector<8x128xf32>
    %68 = arith.addf %67, %66 : vector<8x128xf32>
    %69 = arith.divf %67, %68 : vector<8x128xf32>
    %70 = math.tanh %64 : vector<8x128xf32>
    %71 = vector.extract_strided_slice %69 {offsets = [0, 0], sizes = [8, 32], strides = [1, 1]} : vector<8x128xf32> to vector<8x32xf32>
    %72 = vector.extract_strided_slice %69 {offsets = [0, 32], sizes = [8, 32], strides = [1, 1]} : vector<8x128xf32> to vector<8x32xf32>
    %73 = vector.extract_strided_slice %69 {offsets = [0, 96], sizes = [8, 32], strides = [1, 1]} : vector<8x128xf32> to vector<8x32xf32>
    %74 = vector.extract_strided_slice %70 {offsets = [0, 64], sizes = [8, 32], strides = [1, 1]} : vector<8x128xf32> to vector<8x32xf32>
    %75 = arith.mulf %72, %54 : vector<8x32xf32>
    %76 = arith.mulf %71, %74 : vector<8x32xf32>
    %77 = arith.addf %75, %76 : vector<8x32xf32>
    %78 = math.tanh %77 : vector<8x32xf32>
    %79 = arith.mulf %73, %78 : vector<8x32xf32>
    %80 = arith.index_cast %60 : i32 to index
    %c0_28 = arith.constant 0 : index
    %81 = vector.load %arg13[%80, %c0_28] : memref<64x32xf32, #tpu.memory_space<vmem>>, vector<8x32xf32>
    tpu.vector_store %arg13[%80, %c0_28], %79 {strides = array<i32>} : memref<64x32xf32, #tpu.memory_space<vmem>>, vector<8x32xf32>,
    %c3_i32 = arith.constant 3 : i32
    %c8_i32_29 = arith.constant 8 : i32
    %82 = arith.muli %c3_i32, %c8_i32_29 : i32
    %83 = tpu.assume_multiple %82, 8 : i32
    %84 = arith.index_cast %83 : i32 to index
    %c0_30 = arith.constant 0 : index
    %85 = vector.load %arg12[%84, %c0_30] : memref<64x128xf32, #tpu.memory_space<vmem>>, vector<8x128xf32>
    %cst_31 = arith.constant dense<0.000000e+00> : vector<8x128xf32>
    %86 = tpu.matmul %79, %10, %cst_31 {dimension_numbers = #tpu.dot_dimension_numbers<[1], [0], [0], [1], [0, 0, 1, 1], [], []>} : vector<8x32xf32>, vector<32x128xf32>, vector<8x128xf32> -> vector<8x128xf32>
    %87 = arith.addf %85, %86 : vector<8x128xf32>
    %88 = arith.negf %87 : vector<8x128xf32>
    %89 = math.exp %88 : vector<8x128xf32>
    %cst_32 = arith.constant 1.000000e+00 : f32
    %90 = vector.broadcast %cst_32 : f32 to vector<8x128xf32>
    %91 = arith.addf %90, %89 : vector<8x128xf32>
    %92 = arith.divf %90, %91 : vector<8x128xf32>
    %93 = math.tanh %87 : vector<8x128xf32>
    %94 = vector.extract_strided_slice %92 {offsets = [0, 0], sizes = [8, 32], strides = [1, 1]} : vector<8x128xf32> to vector<8x32xf32>
    %95 = vector.extract_strided_slice %92 {offsets = [0, 32], sizes = [8, 32], strides = [1, 1]} : vector<8x128xf32> to vector<8x32xf32>
    %96 = vector.extract_strided_slice %92 {offsets = [0, 96], sizes = [8, 32], strides = [1, 1]} : vector<8x128xf32> to vector<8x32xf32>
    %97 = vector.extract_strided_slice %93 {offsets = [0, 64], sizes = [8, 32], strides = [1, 1]} : vector<8x128xf32> to vector<8x32xf32>
    %98 = arith.mulf %95, %77 : vector<8x32xf32>
    %99 = arith.mulf %94, %97 : vector<8x32xf32>
    %100 = arith.addf %98, %99 : vector<8x32xf32>
    %101 = math.tanh %100 : vector<8x32xf32>
    %102 = arith.mulf %96, %101 : vector<8x32xf32>
    %103 = arith.index_cast %83 : i32 to index
    %c0_33 = arith.constant 0 : index
    %104 = vector.load %arg13[%103, %c0_33] : memref<64x32xf32, #tpu.memory_space<vmem>>, vector<8x32xf32>
    tpu.vector_store %arg13[%103, %c0_33], %102 {strides = array<i32>} : memref<64x32xf32, #tpu.memory_space<vmem>>, vector<8x32xf32>,
    %c4_i32 = arith.constant 4 : i32
    %c8_i32_34 = arith.constant 8 : i32
    %105 = arith.muli %c4_i32, %c8_i32_34 : i32
    %106 = tpu.assume_multiple %105, 8 : i32
    %107 = arith.index_cast %106 : i32 to index
    %c0_35 = arith.constant 0 : index
    %108 = vector.load %arg12[%107, %c0_35] : memref<64x128xf32, #tpu.memory_space<vmem>>, vector<8x128xf32>
    %cst_36 = arith.constant dense<0.000000e+00> : vector<8x128xf32>
    %109 = tpu.matmul %102, %10, %cst_36 {dimension_numbers = #tpu.dot_dimension_numbers<[1], [0], [0], [1], [0, 0, 1, 1], [], []>} : vector<8x32xf32>, vector<32x128xf32>, vector<8x128xf32> -> vector<8x128xf32>
    %110 = arith.addf %108, %109 : vector<8x128xf32>
    %111 = arith.negf %110 : vector<8x128xf32>
    %112 = math.exp %111 : vector<8x128xf32>
    %cst_37 = arith.constant 1.000000e+00 : f32
    %113 = vector.broadcast %cst_37 : f32 to vector<8x128xf32>
    %114 = arith.addf %113, %112 : vector<8x128xf32>
    %115 = arith.divf %113, %114 : vector<8x128xf32>
    %116 = math.tanh %110 : vector<8x128xf32>
    %117 = vector.extract_strided_slice %115 {offsets = [0, 0], sizes = [8, 32], strides = [1, 1]} : vector<8x128xf32> to vector<8x32xf32>
    %118 = vector.extract_strided_slice %115 {offsets = [0, 32], sizes = [8, 32], strides = [1, 1]} : vector<8x128xf32> to vector<8x32xf32>
    %119 = vector.extract_strided_slice %115 {offsets = [0, 96], sizes = [8, 32], strides = [1, 1]} : vector<8x128xf32> to vector<8x32xf32>
    %120 = vector.extract_strided_slice %116 {offsets = [0, 64], sizes = [8, 32], strides = [1, 1]} : vector<8x128xf32> to vector<8x32xf32>
    %121 = arith.mulf %118, %100 : vector<8x32xf32>
    %122 = arith.mulf %117, %120 : vector<8x32xf32>
    %123 = arith.addf %121, %122 : vector<8x32xf32>
    %124 = math.tanh %123 : vector<8x32xf32>
    %125 = arith.mulf %119, %124 : vector<8x32xf32>
    %126 = arith.index_cast %106 : i32 to index
    %c0_38 = arith.constant 0 : index
    %127 = vector.load %arg13[%126, %c0_38] : memref<64x32xf32, #tpu.memory_space<vmem>>, vector<8x32xf32>
    tpu.vector_store %arg13[%126, %c0_38], %125 {strides = array<i32>} : memref<64x32xf32, #tpu.memory_space<vmem>>, vector<8x32xf32>,
    %c5_i32 = arith.constant 5 : i32
    %c8_i32_39 = arith.constant 8 : i32
    %128 = arith.muli %c5_i32, %c8_i32_39 : i32
    %129 = tpu.assume_multiple %128, 8 : i32
    %130 = arith.index_cast %129 : i32 to index
    %c0_40 = arith.constant 0 : index
    %131 = vector.load %arg12[%130, %c0_40] : memref<64x128xf32, #tpu.memory_space<vmem>>, vector<8x128xf32>
    %cst_41 = arith.constant dense<0.000000e+00> : vector<8x128xf32>
    %132 = tpu.matmul %125, %10, %cst_41 {dimension_numbers = #tpu.dot_dimension_numbers<[1], [0], [0], [1], [0, 0, 1, 1], [], []>} : vector<8x32xf32>, vector<32x128xf32>, vector<8x128xf32> -> vector<8x128xf32>
    %133 = arith.addf %131, %132 : vector<8x128xf32>
    %134 = arith.negf %133 : vector<8x128xf32>
    %135 = math.exp %134 : vector<8x128xf32>
    %cst_42 = arith.constant 1.000000e+00 : f32
    %136 = vector.broadcast %cst_42 : f32 to vector<8x128xf32>
    %137 = arith.addf %136, %135 : vector<8x128xf32>
    %138 = arith.divf %136, %137 : vector<8x128xf32>
    %139 = math.tanh %133 : vector<8x128xf32>
    %140 = vector.extract_strided_slice %138 {offsets = [0, 0], sizes = [8, 32], strides = [1, 1]} : vector<8x128xf32> to vector<8x32xf32>
    %141 = vector.extract_strided_slice %138 {offsets = [0, 32], sizes = [8, 32], strides = [1, 1]} : vector<8x128xf32> to vector<8x32xf32>
    %142 = vector.extract_strided_slice %138 {offsets = [0, 96], sizes = [8, 32], strides = [1, 1]} : vector<8x128xf32> to vector<8x32xf32>
    %143 = vector.extract_strided_slice %139 {offsets = [0, 64], sizes = [8, 32], strides = [1, 1]} : vector<8x128xf32> to vector<8x32xf32>
    %144 = arith.mulf %141, %123 : vector<8x32xf32>
    %145 = arith.mulf %140, %143 : vector<8x32xf32>
    %146 = arith.addf %144, %145 : vector<8x32xf32>
    %147 = math.tanh %146 : vector<8x32xf32>
    %148 = arith.mulf %142, %147 : vector<8x32xf32>
    %149 = arith.index_cast %129 : i32 to index
    %c0_43 = arith.constant 0 : index
    %150 = vector.load %arg13[%149, %c0_43] : memref<64x32xf32, #tpu.memory_space<vmem>>, vector<8x32xf32>
    tpu.vector_store %arg13[%149, %c0_43], %148 {strides = array<i32>} : memref<64x32xf32, #tpu.memory_space<vmem>>, vector<8x32xf32>,
    %c6_i32 = arith.constant 6 : i32
    %c8_i32_44 = arith.constant 8 : i32
    %151 = arith.muli %c6_i32, %c8_i32_44 : i32
    %152 = tpu.assume_multiple %151, 8 : i32
    %153 = arith.index_cast %152 : i32 to index
    %c0_45 = arith.constant 0 : index
    %154 = vector.load %arg12[%153, %c0_45] : memref<64x128xf32, #tpu.memory_space<vmem>>, vector<8x128xf32>
    %cst_46 = arith.constant dense<0.000000e+00> : vector<8x128xf32>
    %155 = tpu.matmul %148, %10, %cst_46 {dimension_numbers = #tpu.dot_dimension_numbers<[1], [0], [0], [1], [0, 0, 1, 1], [], []>} : vector<8x32xf32>, vector<32x128xf32>, vector<8x128xf32> -> vector<8x128xf32>
    %156 = arith.addf %154, %155 : vector<8x128xf32>
    %157 = arith.negf %156 : vector<8x128xf32>
    %158 = math.exp %157 : vector<8x128xf32>
    %cst_47 = arith.constant 1.000000e+00 : f32
    %159 = vector.broadcast %cst_47 : f32 to vector<8x128xf32>
    %160 = arith.addf %159, %158 : vector<8x128xf32>
    %161 = arith.divf %159, %160 : vector<8x128xf32>
    %162 = math.tanh %156 : vector<8x128xf32>
    %163 = vector.extract_strided_slice %161 {offsets = [0, 0], sizes = [8, 32], strides = [1, 1]} : vector<8x128xf32> to vector<8x32xf32>
    %164 = vector.extract_strided_slice %161 {offsets = [0, 32], sizes = [8, 32], strides = [1, 1]} : vector<8x128xf32> to vector<8x32xf32>
    %165 = vector.extract_strided_slice %161 {offsets = [0, 96], sizes = [8, 32], strides = [1, 1]} : vector<8x128xf32> to vector<8x32xf32>
    %166 = vector.extract_strided_slice %162 {offsets = [0, 64], sizes = [8, 32], strides = [1, 1]} : vector<8x128xf32> to vector<8x32xf32>
    %167 = arith.mulf %164, %146 : vector<8x32xf32>
    %168 = arith.mulf %163, %166 : vector<8x32xf32>
    %169 = arith.addf %167, %168 : vector<8x32xf32>
    %170 = math.tanh %169 : vector<8x32xf32>
    %171 = arith.mulf %165, %170 : vector<8x32xf32>
    %172 = arith.index_cast %152 : i32 to index
    %c0_48 = arith.constant 0 : index
    %173 = vector.load %arg13[%172, %c0_48] : memref<64x32xf32, #tpu.memory_space<vmem>>, vector<8x32xf32>
    tpu.vector_store %arg13[%172, %c0_48], %171 {strides = array<i32>} : memref<64x32xf32, #tpu.memory_space<vmem>>, vector<8x32xf32>,
    %c7_i32 = arith.constant 7 : i32
    %c8_i32_49 = arith.constant 8 : i32
    %174 = arith.muli %c7_i32, %c8_i32_49 : i32
    %175 = tpu.assume_multiple %174, 8 : i32
    %176 = arith.index_cast %175 : i32 to index
    %c0_50 = arith.constant 0 : index
    %177 = vector.load %arg12[%176, %c0_50] : memref<64x128xf32, #tpu.memory_space<vmem>>, vector<8x128xf32>
    %cst_51 = arith.constant dense<0.000000e+00> : vector<8x128xf32>
    %178 = tpu.matmul %171, %10, %cst_51 {dimension_numbers = #tpu.dot_dimension_numbers<[1], [0], [0], [1], [0, 0, 1, 1], [], []>} : vector<8x32xf32>, vector<32x128xf32>, vector<8x128xf32> -> vector<8x128xf32>
    %179 = arith.addf %177, %178 : vector<8x128xf32>
    %180 = arith.negf %179 : vector<8x128xf32>
    %181 = math.exp %180 : vector<8x128xf32>
    %cst_52 = arith.constant 1.000000e+00 : f32
    %182 = vector.broadcast %cst_52 : f32 to vector<8x128xf32>
    %183 = arith.addf %182, %181 : vector<8x128xf32>
    %184 = arith.divf %182, %183 : vector<8x128xf32>
    %185 = math.tanh %179 : vector<8x128xf32>
    %186 = vector.extract_strided_slice %184 {offsets = [0, 0], sizes = [8, 32], strides = [1, 1]} : vector<8x128xf32> to vector<8x32xf32>
    %187 = vector.extract_strided_slice %184 {offsets = [0, 32], sizes = [8, 32], strides = [1, 1]} : vector<8x128xf32> to vector<8x32xf32>
    %188 = vector.extract_strided_slice %184 {offsets = [0, 96], sizes = [8, 32], strides = [1, 1]} : vector<8x128xf32> to vector<8x32xf32>
    %189 = vector.extract_strided_slice %185 {offsets = [0, 64], sizes = [8, 32], strides = [1, 1]} : vector<8x128xf32> to vector<8x32xf32>
    %190 = arith.mulf %187, %169 : vector<8x32xf32>
    %191 = arith.mulf %186, %189 : vector<8x32xf32>
    %192 = arith.addf %190, %191 : vector<8x32xf32>
    %193 = math.tanh %192 : vector<8x32xf32>
    %194 = arith.mulf %188, %193 : vector<8x32xf32>
    %195 = arith.index_cast %175 : i32 to index
    %c0_53 = arith.constant 0 : index
    %196 = vector.load %arg13[%195, %c0_53] : memref<64x32xf32, #tpu.memory_space<vmem>>, vector<8x32xf32>
    tpu.vector_store %arg13[%195, %c0_53], %194 {strides = array<i32>} : memref<64x32xf32, #tpu.memory_space<vmem>>, vector<8x32xf32>,
    %c8_i32_54 = arith.constant 8 : i32
    %c0_55 = arith.constant 0 : index
    %c0_56 = arith.constant 0 : index
    %197 = vector.load %arg10[%c0_55, %c0_56] : memref<8x32xf32, #tpu.memory_space<vmem>>, vector<8x32xf32>
    tpu.vector_store %arg10[%c0_55, %c0_56], %194 {strides = array<i32>} : memref<8x32xf32, #tpu.memory_space<vmem>>, vector<8x32xf32>,
    %c0_57 = arith.constant 0 : index
    %c0_58 = arith.constant 0 : index
    %198 = vector.load %arg11[%c0_57, %c0_58] : memref<8x32xf32, #tpu.memory_space<vmem>>, vector<8x32xf32>
    tpu.vector_store %arg11[%c0_57, %c0_58], %192 {strides = array<i32>} : memref<8x32xf32, #tpu.memory_space<vmem>>, vector<8x32xf32>,
    %c0_59 = arith.constant 0 : index
    %c0_60 = arith.constant 0 : index
    %199 = vector.load %arg13[%c0_59, %c0_60] : memref<64x32xf32, #tpu.memory_space<vmem>>, vector<64x32xf32>
    %c0_61 = arith.constant 0 : index
    %c0_62 = arith.constant 0 : index
    %200 = vector.load %arg5[%c0_61, %c0_62] : memref<32x128xf32, #tpu.memory_space<vmem>>, vector<32x128xf32>
    %cst_63 = arith.constant dense<0.000000e+00> : vector<64x128xf32>
    %201 = tpu.matmul %199, %200, %cst_63 {dimension_numbers = #tpu.dot_dimension_numbers<[1], [0], [0], [1], [0, 0, 1, 1], [], []>} : vector<64x32xf32>, vector<32x128xf32>, vector<64x128xf32> -> vector<64x128xf32>
    %c0_64 = arith.constant 0 : index
    %c0_65 = arith.constant 0 : index
    %202 = vector.load %arg6[%c0_64, %c0_65] : memref<1x128xf32, #tpu.memory_space<vmem>>, vector<1x128xf32>
    %203 = vector.broadcast %202 : vector<1x128xf32> to vector<64x128xf32>
    %204 = arith.addf %201, %203 : vector<64x128xf32>
    %c0_66 = arith.constant 0 : index
    %c0_67 = arith.constant 0 : index
    %205 = vector.load %arg9[%c0_66, %c0_67] : memref<64x128xf32, #tpu.memory_space<vmem>>, vector<64x128xf32>
    tpu.vector_store %arg9[%c0_66, %c0_67], %204 {strides = array<i32>} : memref<64x128xf32, #tpu.memory_space<vmem>>, vector<64x128xf32>,
    return
  }
  func.func @transform_0(%arg0: i32) -> (i32, i32) {
    %c0_i32 = arith.constant 0 : i32
    %c0_i32_0 = arith.constant 0 : i32
    return %arg0, %c0_i32 : i32, i32
  }
  func.func @transform_1(%arg0: i32) -> (i32, i32) {
    %c0_i32 = arith.constant 0 : i32
    %c0_i32_0 = arith.constant 0 : i32
    %c0_i32_1 = arith.constant 0 : i32
    return %c0_i32, %c0_i32_0 : i32, i32
  }
  func.func @transform_2(%arg0: i32) -> (i32, i32) {
    %c0_i32 = arith.constant 0 : i32
    %c0_i32_0 = arith.constant 0 : i32
    %c0_i32_1 = arith.constant 0 : i32
    return %c0_i32, %c0_i32_0 : i32, i32
  }
  func.func @transform_3(%arg0: i32) -> (i32, i32) {
    %c0_i32 = arith.constant 0 : i32
    %c0_i32_0 = arith.constant 0 : i32
    %c0_i32_1 = arith.constant 0 : i32
    return %c0_i32, %c0_i32_0 : i32, i32
  }
  func.func @transform_4(%arg0: i32) -> (i32, i32) {
    %c0_i32 = arith.constant 0 : i32
    %c0_i32_0 = arith.constant 0 : i32
    %c0_i32_1 = arith.constant 0 : i32
    return %c0_i32, %c0_i32_0 : i32, i32
  }
  func.func @transform_5(%arg0: i32) -> (i32, i32) {
    %c0_i32 = arith.constant 0 : i32
    %c0_i32_0 = arith.constant 0 : i32
    %c0_i32_1 = arith.constant 0 : i32
    return %c0_i32, %c0_i32_0 : i32, i32
  }
  func.func @transform_6(%arg0: i32) -> (i32, i32) {
    %c0_i32 = arith.constant 0 : i32
    %c0_i32_0 = arith.constant 0 : i32
    %c0_i32_1 = arith.constant 0 : i32
    return %c0_i32, %c0_i32_0 : i32, i32
  }
  func.func @transform_7(%arg0: i32) -> (i32, i32) {
    %c0_i32 = arith.constant 0 : i32
    %c0_i32_0 = arith.constant 0 : i32
    %c0_i32_1 = arith.constant 0 : i32
    return %c0_i32, %c0_i32_0 : i32, i32
  }
  func.func @transform_8(%arg0: i32) -> (i32, i32) {
    %c0_i32 = arith.constant 0 : i32
    %c0_i32_0 = arith.constant 0 : i32
    return %arg0, %c0_i32 : i32, i32
  }
  func.func @transform_9(%arg0: i32) -> (i32, i32) {
    %c0_i32 = arith.constant 0 : i32
    %c0_i32_0 = arith.constant 0 : i32
    %c0_i32_1 = arith.constant 0 : i32
    return %c0_i32, %c0_i32_0 : i32, i32
  }
  func.func @transform_10(%arg0: i32) -> (i32, i32) {
    %c0_i32 = arith.constant 0 : i32
    %c0_i32_0 = arith.constant 0 : i32
    %c0_i32_1 = arith.constant 0 : i32
    return %c0_i32, %c0_i32_0 : i32, i32
  }
}

</mosaic_0001>

<llo_original>
// kernel: tpu_custom_call.1
$region0: #{tpu_custom_call.1}
  #allocation0 [shape = 'u32[]', space=smem, size = 0x4, offset = 0x4, fixed_abs, tag = 'smem constant byte address 0x4 - core index']
  #allocation1 [shape = 'u32[72,128]{1,0:T(1,128)}', space=vmem, size = 0x9000, scoped, tag = 'internal scratch']
  #allocation2 [shape = 'f32[64,128]{1,0:T(8,128)}', space=vmem, size = 0x8000, scoped, tag = 'scratch operand']
  #allocation3 [shape = 'f32[64,32]{1,0:T(8,128)}', space=vmem, size = 0x8000, scoped, tag = 'scratch operand']
  %s0 = inlined_call_operand.vmem [shape: f32[64,12], index: 0, kind: input, shape index: {}]
  %s1 = inlined_call_operand.vmem [shape: f32[12,128], index: 1, kind: input, shape index: {}]
  %s2 = inlined_call_operand.vmem [shape: f32[32,128], index: 2, kind: input, shape index: {}]
  %s3 = inlined_call_operand.vmem [shape: f32[1,128], index: 3, kind: input, shape index: {}]
  %s4 = inlined_call_operand.vmem [shape: f32[32,128], index: 4, kind: input, shape index: {}]
  %s5 = inlined_call_operand.vmem [shape: f32[1,128], index: 5, kind: input, shape index: {}]
  %s6 = inlined_call_operand.hbm [shape: f32[8,32], index: 6, kind: input, shape index: {}]
  %s7 = inlined_call_operand.hbm [shape: f32[8,32], index: 7, kind: input, shape index: {}]
  %s8 = inlined_call_operand.hbm [shape: f32[64,128], index: 8, kind: output, shape index: {0}]
  %s9 = inlined_call_operand.hbm [shape: f32[8,32], index: 9, kind: output, shape index: {1}]
  %s10 = inlined_call_operand.hbm [shape: f32[8,32], index: 10, kind: output, shape index: {2}]
  %11 = xla_tuple %s8, %s9, %s10
  %s12 = sld [smem:[#allocation0]]
  $region70: #{tpu_custom_call.1} parent=0
    _
  %s14 = ssub.s32 1, %s12
  %s15 = scalar_select 0, %s14, %s12
  $region1: #{tpu_custom_call.1} parent=0
    #allocation4 [shape = 'u8[4096]{0}', space=vmem, size = 0x1000, scoped, tag = 'input window, operand 6, single buffered']
    #allocation5 [shape = 's32[1]{0}', space=sflag, size = 0x4, scoped, tag = 'scoped memory for tpu_custom_call.1']
    #allocation6 [shape = 's32[1]{0}', space=sflag, size = 0x4, scoped, tag = 'scoped memory for tpu_custom_call.1']
    #allocation7 [shape = 'u8[4096]{0}', space=vmem, size = 0x1000, scoped, tag = 'input window, operand 7, single buffered']
    #allocation8 [shape = 's32[1]{0}', space=sflag, size = 0x4, scoped, tag = 'scoped memory for tpu_custom_call.1']
    #allocation9 [shape = 'u8[32768]{0}', space=vmem, size = 0x8000, scoped, tag = 'output window, operand 0, single buffered']
    #allocation10 [shape = 'u8[4096]{0}', space=vmem, size = 0x1000, scoped, tag = 'output window, operand 1, single buffered']
    #allocation11 [shape = 's32[1]{0}', space=sflag, size = 0x4, scoped, tag = 'scoped memory for tpu_custom_call.1']
    #allocation12 [shape = 'u8[4096]{0}', space=vmem, size = 0x1000, scoped, tag = 'output window, operand 2, single buffered']
    %16 = vsyncpa [#allocation5], 0
    %17 = vsyncpa [#allocation8], 0
    %18 = vsyncpa [#allocation6], 0
    %19 = vsyncpa [#allocation11], 0
    // Predicated region
    $region2: #{tpu_custom_call.1} parent=1 // pred_check
      _
    $region3: #{tpu_custom_call.1} parent=1 // pred_check_branch
      %21 = sbr.rel (0) target = $region5
    $region4: #{tpu_custom_call.1} parent=1 // pred_region
      _
    $region5: #{tpu_custom_call.1} parent=1 // pred_fallthru
      _
    // Predicated region
    $region6: #{tpu_custom_call.1} parent=1 // pred_check
      _
    $region7: #{tpu_custom_call.1} parent=1 // pred_check_branch
      %23 = sbr.rel (0) target = $region9
    $region8: #{tpu_custom_call.1} parent=1 // pred_region
      _
    $region9: #{tpu_custom_call.1} parent=1 // pred_fallthru
      _
    // Predicated region
    $region10: #{tpu_custom_call.1} parent=1 // pred_check
      _
    $region11: #{tpu_custom_call.1} parent=1 // pred_check_branch
      %25 = sbr.rel (0) target = $region13
    $region12: #{tpu_custom_call.1} parent=1 // pred_region
      _
    $region13: #{tpu_custom_call.1} parent=1 // pred_fallthru
      _
    // Predicated region
    $region14: #{tpu_custom_call.1} parent=1 // pred_check
      _
    $region15: #{tpu_custom_call.1} parent=1 // pred_check_branch
      %27 = sbr.rel (0) target = $region17
    $region16: #{tpu_custom_call.1} parent=1 // pred_region
      _
    $region17: #{tpu_custom_call.1} parent=1 // pred_fallthru
      _
    // Predicated region
    $region18: #{tpu_custom_call.1} parent=1 // pred_check
      _
    $region19: #{tpu_custom_call.1} parent=1 // pred_check_branch
      %29 = sbr.rel (0) target = $region21
    $region20: #{tpu_custom_call.1} parent=1 // pred_region
      _
    $region21: #{tpu_custom_call.1} parent=1 // pred_fallthru
      _
    // Predicated region
    $region22: #{tpu_custom_call.1} parent=1 // pred_check
      _
    $region23: #{tpu_custom_call.1} parent=1 // pred_check_branch
      %31 = sbr.rel (0) target = $region25
    $region24: #{tpu_custom_call.1} parent=1 // pred_region
      _
    $region25: #{tpu_custom_call.1} parent=1 // pred_fallthru
      _
    // Predicated region
    $region26: #{tpu_custom_call.1} parent=1 // pred_check
      _
    $region27: #{tpu_custom_call.1} parent=1 // pred_check_branch
      %33 = sbr.rel (0) target = $region29
    $region28: #{tpu_custom_call.1} parent=1 // pred_region
      %35 = vsyncadd [#allocation5], 0
      %s37 = sshll.u32 %s6, 4
      %s38 = int_to_ptr.hbm [resolvable:$true] %s37
      %s39 = sshll.u32 [#allocation4], 4
      %s40 = int_to_ptr.vmem [resolvable:$true] %s39
      %42 = dma.hbm_to_vmem [thread:$0]  %s38, 128, %s40, [#allocation5]
    $region29: #{tpu_custom_call.1} parent=1 // pred_fallthru
      _
    // Predicated region
    $region30: #{tpu_custom_call.1} parent=1 // pred_check
      _
    $region31: #{tpu_custom_call.1} parent=1 // pred_check_branch
      %44 = sbr.rel (0) target = $region33
    $region32: #{tpu_custom_call.1} parent=1 // pred_region
      %46 = vsyncadd [#allocation8], 0
      %s48 = sshll.u32 %s7, 4
      %s49 = int_to_ptr.hbm [resolvable:$true] %s48
      %s50 = sshll.u32 [#allocation7], 4
      %s51 = int_to_ptr.vmem [resolvable:$true] %s50
      %53 = dma.hbm_to_vmem [thread:$0]  %s49, 128, %s51, [#allocation8]
    $region33: #{tpu_custom_call.1} parent=1 // pred_fallthru
      _
    // Predicated region
    $region34: #{tpu_custom_call.1} parent=1 // pred_check
      _
    $region35: #{tpu_custom_call.1} parent=1 // pred_check_branch
      %55 = sbr.rel (0) target = $region37
    $region36: #{tpu_custom_call.1} parent=1 // pred_region
      %57 = dma.done [#allocation5], 128
    $region37: #{tpu_custom_call.1} parent=1 // pred_fallthru
      _
    // Predicated region
    $region38: #{tpu_custom_call.1} parent=1 // pred_check
      _
    $region39: #{tpu_custom_call.1} parent=1 // pred_check_branch
      %59 = sbr.rel (0) target = $region41
    $region40: #{tpu_custom_call.1} parent=1 // pred_region
      %61 = dma.done [#allocation8], 128
    $region41: #{tpu_custom_call.1} parent=1 // pred_fallthru
      _
    %p62 = scmp.eq.s32.totalorder 0, 0
    // Predicated region
    $region42: #{tpu_custom_call.1} parent=1 // pred_check
      %p63 = pneg %p62
    $region43: #{tpu_custom_call.1} parent=1 // pred_check_branch
      %65 = sbr.rel (%p63) target = $region45
    $region44: #{tpu_custom_call.1} parent=1 // pred_region
      %v66 = vld [vmem:[#allocation4] sm:$0xff]
      %vm67 = vcmask 261120
      %68 = vst.msk [vmem:[#allocation10] sm:$0xff] %vm67, %v66
      %v69 = vld [vmem:[#allocation7] sm:$0xff]
      %70 = vst.msk [vmem:[#allocation12] sm:$0xff] %vm67, %v69
    $region45: #{tpu_custom_call.1} parent=1 // pred_fallthru
      _
    %v71 = vld [vmem:[%s0] sm:$0xff]
    %v72 = vld [vmem:[%s0 + $0x8] sm:$0xff]
    %v73 = vld [vmem:[%s0 + $0x10] sm:$0xff]
    %v74 = vld [vmem:[%s0 + $0x18] sm:$0xff]
    %v75 = vld [vmem:[%s0 + $0x20] sm:$0xff]
    %v76 = vld [vmem:[%s0 + $0x28] sm:$0xff]
    %v77 = vld [vmem:[%s0 + $0x30] sm:$0xff]
    %v78 = vld [vmem:[%s0 + $0x38] sm:$0xff]
    %v79 = vld [vmem:[%s1] sm:$0xff]
    %v80 = vld [vmem:[%s1 + $0x8] sm:$0xf]
    %v81 = vld [vmem:[%s3] sm:$0x1]
    %v83 = vperm.slane %v81, 0
    %vm85 = vcmask 97280
    %v87 = vsel %vm85, %v71, 0
    %v90 = vsel %vm85, %v72, 0
    %v93 = vsel %vm85, %v73, 0
    %v96 = vsel %vm85, %v74, 0
    %v99 = vsel %vm85, %v75, 0
    %v102 = vsel %vm85, %v76, 0
    %v105 = vsel %vm85, %v77, 0
    %v108 = vsel %vm85, %v78, 0
    %vm110 = vcmask 1043456
    %v112 = vsel %vm110, %v80, 0
    %114 = vmatpush.msra.mxu0 0.0
    %115 = vmatpush.msra.mxu0 0.0
    %116 = vmatpush.msra.mxu0 0.0
    %117 = vmatpush.msra.mxu0 0.0
    %118 = vmatpush.msra.mxu0 0.0
    %119 = vmatpush.msra.mxu0 0.0
    %120 = vmatpush.msra.mxu0 0.0
    %121 = vmatpush.msra.mxu0 0.0
    %122 = vmatpush.msra.mxu0 0.0
    %123 = vmatpush.msra.mxu0 0.0
    %124 = vmatpush.msra.mxu0 0.0
    %125 = vmatpush.msra.mxu0 0.0
    %126 = vmatpush.msra.mxu0 0.0
    %127 = vmatpush.msra.mxu0 0.0
    %128 = vmatpush.msra.mxu0 %v112
    %129 = vmatpush.msra.mxu0 %v79
    %130 = vmatmul.f32.gmra.mxu0 %v87
    %v131 = vpop.f32.mrf.mxu0
    %v132 = vadd.f32 %v83, %v131
    %133 = vmatmul.f32.gmra.mxu0 %v90
    %v134 = vpop.f32.mrf.mxu0
    %v135 = vadd.f32 %v83, %v134
    %136 = vmatmul.f32.gmra.mxu0 %v93
    %v137 = vpop.f32.mrf.mxu0
    %v138 = vadd.f32 %v83, %v137
    %139 = vmatmul.f32.gmra.mxu0 %v96
    %v140 = vpop.f32.mrf.mxu0
    %v141 = vadd.f32 %v83, %v140
    %142 = vmatmul.f32.gmra.mxu0 %v99
    %v143 = vpop.f32.mrf.mxu0
    %v144 = vadd.f32 %v83, %v143
    %145 = vmatmul.f32.gmra.mxu0 %v102
    %v146 = vpop.f32.mrf.mxu0
    %v147 = vadd.f32 %v83, %v146
    %148 = vmatmul.f32.gmra.mxu0 %v105
    %v149 = vpop.f32.mrf.mxu0
    %v150 = vadd.f32 %v83, %v149
    %151 = vmatmul.f32.gmra.mxu0 %v108
    %v152 = vpop.f32.mrf.mxu0
    %v153 = vadd.f32 %v83, %v152
    %154 = vdwg.mxu0
    %155 = vst [vmem:[#allocation2] sm:$0xff] %v132
    %156 = vst [vmem:[#allocation2 + $0x8] sm:$0xff] %v135
    %157 = vst [vmem:[#allocation2 + $0x10] sm:$0xff] %v138
    %158 = vst [vmem:[#allocation2 + $0x18] sm:$0xff] %v141
    %159 = vst [vmem:[#allocation2 + $0x20] sm:$0xff] %v144
    %160 = vst [vmem:[#allocation2 + $0x28] sm:$0xff] %v147
    %161 = vst [vmem:[#allocation2 + $0x30] sm:$0xff] %v150
    %162 = vst [vmem:[#allocation2 + $0x38] sm:$0xff] %v153
    %v163 = vld [vmem:[%s2] sm:$0xff]
    %v164 = vld [vmem:[%s2 + $0x8] sm:$0xff]
    %v165 = vld [vmem:[%s2 + $0x10] sm:$0xff]
    %v166 = vld [vmem:[%s2 + $0x18] sm:$0xff]
    %v167 = vld [vmem:[#allocation10] sm:$0xff]
    %v168 = vld [vmem:[#allocation12] sm:$0xff]
    %v169 = vld [vmem:[#allocation2] sm:$0xff]
    %vm170 = vcmask 261120
    %v172 = vsel %vm170, %v167, 0
    %174 = vmatpush.msra.mxu0 0.0
    %175 = vmatpush.msra.mxu0 0.0
    %176 = vmatpush.msra.mxu0 0.0
    %177 = vmatpush.msra.mxu0 0.0
    %178 = vmatpush.msra.mxu0 0.0
    %179 = vmatpush.msra.mxu0 0.0
    %180 = vmatpush.msra.mxu0 0.0
    %181 = vmatpush.msra.mxu0 0.0
    %182 = vmatpush.msra.mxu0 0.0
    %183 = vmatpush.msra.mxu0 0.0
    %184 = vmatpush.msra.mxu0 0.0
    %185 = vmatpush.msra.mxu0 0.0
    %186 = vmatpush.msra.mxu0 %v166
    %187 = vmatpush.msra.mxu0 %v165
    %188 = vmatpush.msra.mxu0 %v164
    %189 = vmatpush.msra.mxu0 %v163
    %190 = vmatmul.f32.gmra.mxu0 %v172
    %v191 = vpop.f32.mrf.mxu0
    %v192 = vadd.f32 0.0, %v191
    %193 = vdwg.mxu0
    %v194 = vadd.f32 %v169, %v192
    %v195 = vxor.u32 %v194, 2147483648
    %v196 = vmul.f32 %v195, 1.442695
    %v197 = vpow.pop %v196
    %v198 = vadd.f32 %v197, 1.0
    %v199 = vrcp.pop %v198
    %v200 = vmul.f32 %v198, %v199
    %v201 = vsub.f32 1.0, %v200
    %v202 = vmul.f32 %v199, %v201
    %v203 = vadd.f32 %v199, %v202
    %vm204 = vweird.f32 %v198
    %vm205 = vweird.f32 %v199
    %vm206 = vmor %vm204, %vm205
    %v207 = vsel %vm206, %v199, %v203
    %v208 = vand.u32 2147483647, %v198
    %vm209 = vcmp.eq.f32.partialorder %v208, 8.507059e+37
    %v210 = vand.u32 %v198, 2147483648
    %v211 = vor.u32 1.1754944e-38, %v210
    %v212 = vsel %vm209, %v211, %v207
    %v213 = vmul.f32 1.0, %v212
    %v214 = vtanh.pop %v194
    %216 = vrot.lane.b32.xlu0 %v168, 32
    %v217 = vpop.permute.xlu0 %216
    %v219 = vmul.f32 %v213, %v217
    %221 = vrot.lane.b32.xlu0 %v214, 64
    %v222 = vpop.permute.xlu0 %221
    %v224 = vmul.f32 %v213, %v222
    %226 = vrot.lane.b32.xlu0 %v224, 32
    %v227 = vpop.permute.xlu0 %226
    %v229 = vadd.f32 %v219, %v227
    %v230 = vtanh.pop %v229
    %232 = vrot.lane.b32.xlu0 %v230, 64
    %v233 = vpop.permute.xlu0 %232
    %v235 = vmul.f32 %v213, %v233
    %237 = vrot.lane.b32.xlu0 %v235, 32
    %v238 = vpop.permute.xlu0 %237
    %240 = vst.msk [vmem:[#allocation3] sm:$0xff] %vm170, %v238
    %s241 = scalar_lea.vmem [#allocation2], 8
    %v242 = vld [vmem:[%s241] sm:$0xff]
    %v243 = vsel %vm170, %v238, 0
    %245 = vmatpush.msra.mxu0 0.0
    %246 = vmatpush.msra.mxu0 0.0
    %247 = vmatpush.msra.mxu0 0.0
    %248 = vmatpush.msra.mxu0 0.0
    %249 = vmatpush.msra.mxu0 0.0
    %250 = vmatpush.msra.mxu0 0.0
    %251 = vmatpush.msra.mxu0 0.0
    %252 = vmatpush.msra.mxu0 0.0
    %253 = vmatpush.msra.mxu0 0.0
    %254 = vmatpush.msra.mxu0 0.0
    %255 = vmatpush.msra.mxu0 0.0
    %256 = vmatpush.msra.mxu0 0.0
    %257 = vmatpush.msra.mxu0 %v166
    %258 = vmatpush.msra.mxu0 %v165
    %259 = vmatpush.msra.mxu0 %v164
    %260 = vmatpush.msra.mxu0 %v163
    %261 = vmatmul.f32.gmra.mxu0 %v243
    %v262 = vpop.f32.mrf.mxu0
    %v263 = vadd.f32 0.0, %v262
    %264 = vdwg.mxu0
    %v265 = vadd.f32 %v242, %v263
    %v266 = vxor.u32 %v265, 2147483648
    %v267 = vmul.f32 %v266, 1.442695
    %v268 = vpow.pop %v267
    %v269 = vadd.f32 %v268, 1.0
    %v270 = vrcp.pop %v269
    %v271 = vmul.f32 %v269, %v270
    %v272 = vsub.f32 1.0, %v271
    %v273 = vmul.f32 %v270, %v272
    %v274 = vadd.f32 %v270, %v273
    %vm275 = vweird.f32 %v269
    %vm276 = vweird.f32 %v270
    %vm277 = vmor %vm275, %vm276
    %v278 = vsel %vm277, %v270, %v274
    %v279 = vand.u32 2147483647, %v269
    %vm280 = vcmp.eq.f32.partialorder %v279, 8.507059e+37
    %v281 = vand.u32 %v269, 2147483648
    %v282 = vor.u32 1.1754944e-38, %v281
    %v283 = vsel %vm280, %v282, %v278
    %v284 = vmul.f32 1.0, %v283
    %v285 = vtanh.pop %v265
    %v286 = vmul.f32 %v284, %v229
    %288 = vrot.lane.b32.xlu0 %v285, 64
    %v289 = vpop.permute.xlu0 %288
    %v291 = vmul.f32 %v284, %v289
    %293 = vrot.lane.b32.xlu0 %v291, 32
    %v294 = vpop.permute.xlu0 %293
    %v296 = vadd.f32 %v286, %v294
    %v297 = vtanh.pop %v296
    %299 = vrot.lane.b32.xlu0 %v297, 64
    %v300 = vpop.permute.xlu0 %299
    %v302 = vmul.f32 %v284, %v300
    %304 = vrot.lane.b32.xlu0 %v302, 32
    %v305 = vpop.permute.xlu0 %304
    %s307 = scalar_lea.vmem [#allocation3], 8
    %308 = vst.msk [vmem:[%s307] sm:$0xff] %vm170, %v305
    %s309 = scalar_lea.vmem [#allocation2], 16
    %v310 = vld [vmem:[%s309] sm:$0xff]
    %v311 = vsel %vm170, %v305, 0
    %313 = vmatpush.msra.mxu0 0.0
    %314 = vmatpush.msra.mxu0 0.0
    %315 = vmatpush.msra.mxu0 0.0
    %316 = vmatpush.msra.mxu0 0.0
    %317 = vmatpush.msra.mxu0 0.0
    %318 = vmatpush.msra.mxu0 0.0
    %319 = vmatpush.msra.mxu0 0.0
    %320 = vmatpush.msra.mxu0 0.0
    %321 = vmatpush.msra.mxu0 0.0
    %322 = vmatpush.msra.mxu0 0.0
    %323 = vmatpush.msra.mxu0 0.0
    %324 = vmatpush.msra.mxu0 0.0
    %325 = vmatpush.msra.mxu0 %v166
    %326 = vmatpush.msra.mxu0 %v165
    %327 = vmatpush.msra.mxu0 %v164
    %328 = vmatpush.msra.mxu0 %v163
    %329 = vmatmul.f32.gmra.mxu0 %v311
    %v330 = vpop.f32.mrf.mxu0
    %v331 = vadd.f32 0.0, %v330
    %332 = vdwg.mxu0
    %v333 = vadd.f32 %v310, %v331
    %v334 = vxor.u32 %v333, 2147483648
    %v335 = vmul.f32 %v334, 1.442695
    %v336 = vpow.pop %v335
    %v337 = vadd.f32 %v336, 1.0
    %v338 = vrcp.pop %v337
    %v339 = vmul.f32 %v337, %v338
    %v340 = vsub.f32 1.0, %v339
    %v341 = vmul.f32 %v338, %v340
    %v342 = vadd.f32 %v338, %v341
    %vm343 = vweird.f32 %v337
    %vm344 = vweird.f32 %v338
    %vm345 = vmor %vm343, %vm344
    %v346 = vsel %vm345, %v338, %v342
    %v347 = vand.u32 2147483647, %v337
    %vm348 = vcmp.eq.f32.partialorder %v347, 8.507059e+37
    %v349 = vand.u32 %v337, 2147483648
    %v350 = vor.u32 1.1754944e-38, %v349
    %v351 = vsel %vm348, %v350, %v346
    %v352 = vmul.f32 1.0, %v351
    %v353 = vtanh.pop %v333
    %v354 = vmul.f32 %v352, %v296
    %356 = vrot.lane.b32.xlu0 %v353, 64
    %v357 = vpop.permute.xlu0 %356
    %v359 = vmul.f32 %v352, %v357
    %361 = vrot.lane.b32.xlu0 %v359, 32
    %v362 = vpop.permute.xlu0 %361
    %v364 = vadd.f32 %v354, %v362
    %v365 = vtanh.pop %v364
    %367 = vrot.lane.b32.xlu0 %v365, 64
    %v368 = vpop.permute.xlu0 %367
    %v370 = vmul.f32 %v352, %v368
    %372 = vrot.lane.b32.xlu0 %v370, 32
    %v373 = vpop.permute.xlu0 %372
    %s375 = scalar_lea.vmem [#allocation3], 16
    %376 = vst.msk [vmem:[%s375] sm:$0xff] %vm170, %v373
    %s377 = scalar_lea.vmem [#allocation2], 24
    %v378 = vld [vmem:[%s377] sm:$0xff]
    %v379 = vsel %vm170, %v373, 0
    %381 = vmatpush.msra.mxu0 0.0
    %382 = vmatpush.msra.mxu0 0.0
    %383 = vmatpush.msra.mxu0 0.0
    %384 = vmatpush.msra.mxu0 0.0
    %385 = vmatpush.msra.mxu0 0.0
    %386 = vmatpush.msra.mxu0 0.0
    %387 = vmatpush.msra.mxu0 0.0
    %388 = vmatpush.msra.mxu0 0.0
    %389 = vmatpush.msra.mxu0 0.0
    %390 = vmatpush.msra.mxu0 0.0
    %391 = vmatpush.msra.mxu0 0.0
    %392 = vmatpush.msra.mxu0 0.0
    %393 = vmatpush.msra.mxu0 %v166
    %394 = vmatpush.msra.mxu0 %v165
    %395 = vmatpush.msra.mxu0 %v164
    %396 = vmatpush.msra.mxu0 %v163
    %397 = vmatmul.f32.gmra.mxu0 %v379
    %v398 = vpop.f32.mrf.mxu0
    %v399 = vadd.f32 0.0, %v398
    %400 = vdwg.mxu0
    %v401 = vadd.f32 %v378, %v399
    %v402 = vxor.u32 %v401, 2147483648
    %v403 = vmul.f32 %v402, 1.442695
    %v404 = vpow.pop %v403
    %v405 = vadd.f32 %v404, 1.0
    %v406 = vrcp.pop %v405
    %v407 = vmul.f32 %v405, %v406
    %v408 = vsub.f32 1.0, %v407
    %v409 = vmul.f32 %v406, %v408
    %v410 = vadd.f32 %v406, %v409
    %vm411 = vweird.f32 %v405
    %vm412 = vweird.f32 %v406
    %vm413 = vmor %vm411, %vm412
    %v414 = vsel %vm413, %v406, %v410
    %v415 = vand.u32 2147483647, %v405
    %vm416 = vcmp.eq.f32.partialorder %v415, 8.507059e+37
    %v417 = vand.u32 %v405, 2147483648
    %v418 = vor.u32 1.1754944e-38, %v417
    %v419 = vsel %vm416, %v418, %v414
    %v420 = vmul.f32 1.0, %v419
    %v421 = vtanh.pop %v401
    %v422 = vmul.f32 %v420, %v364
    %424 = vrot.lane.b32.xlu0 %v421, 64
    %v425 = vpop.permute.xlu0 %424
    %v427 = vmul.f32 %v420, %v425
    %429 = vrot.lane.b32.xlu0 %v427, 32
    %v430 = vpop.permute.xlu0 %429
    %v432 = vadd.f32 %v422, %v430
    %v433 = vtanh.pop %v432
    %435 = vrot.lane.b32.xlu0 %v433, 64
    %v436 = vpop.permute.xlu0 %435
    %v438 = vmul.f32 %v420, %v436
    %440 = vrot.lane.b32.xlu0 %v438, 32
    %v441 = vpop.permute.xlu0 %440
    %s443 = scalar_lea.vmem [#allocation3], 24
    %444 = vst.msk [vmem:[%s443] sm:$0xff] %vm170, %v441
    %s445 = scalar_lea.vmem [#allocation2], 32
    %v446 = vld [vmem:[%s445] sm:$0xff]
    %v447 = vsel %vm170, %v441, 0
    %449 = vmatpush.msra.mxu0 0.0
    %450 = vmatpush.msra.mxu0 0.0
    %451 = vmatpush.msra.mxu0 0.0
    %452 = vmatpush.msra.mxu0 0.0
    %453 = vmatpush.msra.mxu0 0.0
    %454 = vmatpush.msra.mxu0 0.0
    %455 = vmatpush.msra.mxu0 0.0
    %456 = vmatpush.msra.mxu0 0.0
    %457 = vmatpush.msra.mxu0 0.0
    %458 = vmatpush.msra.mxu0 0.0
    %459 = vmatpush.msra.mxu0 0.0
    %460 = vmatpush.msra.mxu0 0.0
    %461 = vmatpush.msra.mxu0 %v166
    %462 = vmatpush.msra.mxu0 %v165
    %463 = vmatpush.msra.mxu0 %v164
    %464 = vmatpush.msra.mxu0 %v163
    %465 = vmatmul.f32.gmra.mxu0 %v447
    %v466 = vpop.f32.mrf.mxu0
    %v467 = vadd.f32 0.0, %v466
    %468 = vdwg.mxu0
    %v469 = vadd.f32 %v446, %v467
    %v470 = vxor.u32 %v469, 2147483648
    %v471 = vmul.f32 %v470, 1.442695
    %v472 = vpow.pop %v471
    %v473 = vadd.f32 %v472, 1.0
    %v474 = vrcp.pop %v473
    %v475 = vmul.f32 %v473, %v474
    %v476 = vsub.f32 1.0, %v475
    %v477 = vmul.f32 %v474, %v476
    %v478 = vadd.f32 %v474, %v477
    %vm479 = vweird.f32 %v473
    %vm480 = vweird.f32 %v474
    %vm481 = vmor %vm479, %vm480
    %v482 = vsel %vm481, %v474, %v478
    %v483 = vand.u32 2147483647, %v473
    %vm484 = vcmp.eq.f32.partialorder %v483, 8.507059e+37
    %v485 = vand.u32 %v473, 2147483648
    %v486 = vor.u32 1.1754944e-38, %v485
    %v487 = vsel %vm484, %v486, %v482
    %v488 = vmul.f32 1.0, %v487
    %v489 = vtanh.pop %v469
    %v490 = vmul.f32 %v488, %v432
    %492 = vrot.lane.b32.xlu0 %v489, 64
    %v493 = vpop.permute.xlu0 %492
    %v495 = vmul.f32 %v488, %v493
    %497 = vrot.lane.b32.xlu0 %v495, 32
    %v498 = vpop.permute.xlu0 %497
    %v500 = vadd.f32 %v490, %v498
    %v501 = vtanh.pop %v500
    %503 = vrot.lane.b32.xlu0 %v501, 64
    %v504 = vpop.permute.xlu0 %503
    %v506 = vmul.f32 %v488, %v504
    %508 = vrot.lane.b32.xlu0 %v506, 32
    %v509 = vpop.permute.xlu0 %508
    %s511 = scalar_lea.vmem [#allocation3], 32
    %512 = vst.msk [vmem:[%s511] sm:$0xff] %vm170, %v509
    %s513 = scalar_lea.vmem [#allocation2], 40
    %v514 = vld [vmem:[%s513] sm:$0xff]
    %v515 = vsel %vm170, %v509, 0
    %517 = vmatpush.msra.mxu0 0.0
    %518 = vmatpush.msra.mxu0 0.0
    %519 = vmatpush.msra.mxu0 0.0
    %520 = vmatpush.msra.mxu0 0.0
    %521 = vmatpush.msra.mxu0 0.0
    %522 = vmatpush.msra.mxu0 0.0
    %523 = vmatpush.msra.mxu0 0.0
    %524 = vmatpush.msra.mxu0 0.0
    %525 = vmatpush.msra.mxu0 0.0
    %526 = vmatpush.msra.mxu0 0.0
    %527 = vmatpush.msra.mxu0 0.0
    %528 = vmatpush.msra.mxu0 0.0
    %529 = vmatpush.msra.mxu0 %v166
    %530 = vmatpush.msra.mxu0 %v165
    %531 = vmatpush.msra.mxu0 %v164
    %532 = vmatpush.msra.mxu0 %v163
    %533 = vmatmul.f32.gmra.mxu0 %v515
    %v534 = vpop.f32.mrf.mxu0
    %v535 = vadd.f32 0.0, %v534
    %536 = vdwg.mxu0
    %v537 = vadd.f32 %v514, %v535
    %v538 = vxor.u32 %v537, 2147483648
    %v539 = vmul.f32 %v538, 1.442695
    %v540 = vpow.pop %v539
    %v541 = vadd.f32 %v540, 1.0
    %v542 = vrcp.pop %v541
    %v543 = vmul.f32 %v541, %v542
    %v544 = vsub.f32 1.0, %v543
    %v545 = vmul.f32 %v542, %v544
    %v546 = vadd.f32 %v542, %v545
    %vm547 = vweird.f32 %v541
    %vm548 = vweird.f32 %v542
    %vm549 = vmor %vm547, %vm548
    %v550 = vsel %vm549, %v542, %v546
    %v551 = vand.u32 2147483647, %v541
    %vm552 = vcmp.eq.f32.partialorder %v551, 8.507059e+37
    %v553 = vand.u32 %v541, 2147483648
    %v554 = vor.u32 1.1754944e-38, %v553
    %v555 = vsel %vm552, %v554, %v550
    %v556 = vmul.f32 1.0, %v555
    %v557 = vtanh.pop %v537
    %v558 = vmul.f32 %v556, %v500
    %560 = vrot.lane.b32.xlu0 %v557, 64
    %v561 = vpop.permute.xlu0 %560
    %v563 = vmul.f32 %v556, %v561
    %565 = vrot.lane.b32.xlu0 %v563, 32
    %v566 = vpop.permute.xlu0 %565
    %v568 = vadd.f32 %v558, %v566
    %v569 = vtanh.pop %v568
    %571 = vrot.lane.b32.xlu0 %v569, 64
    %v572 = vpop.permute.xlu0 %571
    %v574 = vmul.f32 %v556, %v572
    %576 = vrot.lane.b32.xlu0 %v574, 32
    %v577 = vpop.permute.xlu0 %576
    %s579 = scalar_lea.vmem [#allocation3], 40
    %580 = vst.msk [vmem:[%s579] sm:$0xff] %vm170, %v577
    %s581 = scalar_lea.vmem [#allocation2], 48
    %v582 = vld [vmem:[%s581] sm:$0xff]
    %v583 = vsel %vm170, %v577, 0
    %585 = vmatpush.msra.mxu0 0.0
    %586 = vmatpush.msra.mxu0 0.0
    %587 = vmatpush.msra.mxu0 0.0
    %588 = vmatpush.msra.mxu0 0.0
    %589 = vmatpush.msra.mxu0 0.0
    %590 = vmatpush.msra.mxu0 0.0
    %591 = vmatpush.msra.mxu0 0.0
    %592 = vmatpush.msra.mxu0 0.0
    %593 = vmatpush.msra.mxu0 0.0
    %594 = vmatpush.msra.mxu0 0.0
    %595 = vmatpush.msra.mxu0 0.0
    %596 = vmatpush.msra.mxu0 0.0
    %597 = vmatpush.msra.mxu0 %v166
    %598 = vmatpush.msra.mxu0 %v165
    %599 = vmatpush.msra.mxu0 %v164
    %600 = vmatpush.msra.mxu0 %v163
    %601 = vmatmul.f32.gmra.mxu0 %v583
    %v602 = vpop.f32.mrf.mxu0
    %v603 = vadd.f32 0.0, %v602
    %604 = vdwg.mxu0
    %v605 = vadd.f32 %v582, %v603
    %v606 = vxor.u32 %v605, 2147483648
    %v607 = vmul.f32 %v606, 1.442695
    %v608 = vpow.pop %v607
    %v609 = vadd.f32 %v608, 1.0
    %v610 = vrcp.pop %v609
    %v611 = vmul.f32 %v609, %v610
    %v612 = vsub.f32 1.0, %v611
    %v613 = vmul.f32 %v610, %v612
    %v614 = vadd.f32 %v610, %v613
    %vm615 = vweird.f32 %v609
    %vm616 = vweird.f32 %v610
    %vm617 = vmor %vm615, %vm616
    %v618 = vsel %vm617, %v610, %v614
    %v619 = vand.u32 2147483647, %v609
    %vm620 = vcmp.eq.f32.partialorder %v619, 8.507059e+37
    %v621 = vand.u32 %v609, 2147483648
    %v622 = vor.u32 1.1754944e-38, %v621
    %v623 = vsel %vm620, %v622, %v618
    %v624 = vmul.f32 1.0, %v623
    %v625 = vtanh.pop %v605
    %v626 = vmul.f32 %v624, %v568
    %628 = vrot.lane.b32.xlu0 %v625, 64
    %v629 = vpop.permute.xlu0 %628
    %v631 = vmul.f32 %v624, %v629
    %633 = vrot.lane.b32.xlu0 %v631, 32
    %v634 = vpop.permute.xlu0 %633
    %v636 = vadd.f32 %v626, %v634
    %v637 = vtanh.pop %v636
    %639 = vrot.lane.b32.xlu0 %v637, 64
    %v640 = vpop.permute.xlu0 %639
    %v642 = vmul.f32 %v624, %v640
    %644 = vrot.lane.b32.xlu0 %v642, 32
    %v645 = vpop.permute.xlu0 %644
    %s647 = scalar_lea.vmem [#allocation3], 48
    %648 = vst.msk [vmem:[%s647] sm:$0xff] %vm170, %v645
    %s649 = scalar_lea.vmem [#allocation2], 56
    %v650 = vld [vmem:[%s649] sm:$0xff]
    %v651 = vsel %vm170, %v645, 0
    %653 = vmatpush.msra.mxu0 0.0
    %654 = vmatpush.msra.mxu0 0.0
    %655 = vmatpush.msra.mxu0 0.0
    %656 = vmatpush.msra.mxu0 0.0
    %657 = vmatpush.msra.mxu0 0.0
    %658 = vmatpush.msra.mxu0 0.0
    %659 = vmatpush.msra.mxu0 0.0
    %660 = vmatpush.msra.mxu0 0.0
    %661 = vmatpush.msra.mxu0 0.0
    %662 = vmatpush.msra.mxu0 0.0
    %663 = vmatpush.msra.mxu0 0.0
    %664 = vmatpush.msra.mxu0 0.0
    %665 = vmatpush.msra.mxu0 %v166
    %666 = vmatpush.msra.mxu0 %v165
    %667 = vmatpush.msra.mxu0 %v164
    %668 = vmatpush.msra.mxu0 %v163
    %669 = vmatmul.f32.gmra.mxu0 %v651
    %v670 = vpop.f32.mrf.mxu0
    %v671 = vadd.f32 0.0, %v670
    %672 = vdwg.mxu0
    %v673 = vadd.f32 %v650, %v671
    %v674 = vxor.u32 %v673, 2147483648
    %v675 = vmul.f32 %v674, 1.442695
    %v676 = vpow.pop %v675
    %v677 = vadd.f32 %v676, 1.0
    %v678 = vrcp.pop %v677
    %v679 = vmul.f32 %v677, %v678
    %v680 = vsub.f32 1.0, %v679
    %v681 = vmul.f32 %v678, %v680
    %v682 = vadd.f32 %v678, %v681
    %vm683 = vweird.f32 %v677
    %vm684 = vweird.f32 %v678
    %vm685 = vmor %vm683, %vm684
    %v686 = vsel %vm685, %v678, %v682
    %v687 = vand.u32 2147483647, %v677
    %vm688 = vcmp.eq.f32.partialorder %v687, 8.507059e+37
    %v689 = vand.u32 %v677, 2147483648
    %v690 = vor.u32 1.1754944e-38, %v689
    %v691 = vsel %vm688, %v690, %v686
    %v692 = vmul.f32 1.0, %v691
    %v693 = vtanh.pop %v673
    %v694 = vmul.f32 %v692, %v636
    %696 = vrot.lane.b32.xlu0 %v693, 64
    %v697 = vpop.permute.xlu0 %696
    %v699 = vmul.f32 %v692, %v697
    %701 = vrot.lane.b32.xlu0 %v699, 32
    %v702 = vpop.permute.xlu0 %701
    %v704 = vadd.f32 %v694, %v702
    %v705 = vtanh.pop %v704
    %707 = vrot.lane.b32.xlu0 %v705, 64
    %v708 = vpop.permute.xlu0 %707
    %v710 = vmul.f32 %v692, %v708
    %712 = vrot.lane.b32.xlu0 %v710, 32
    %v713 = vpop.permute.xlu0 %712
    %s715 = scalar_lea.vmem [#allocation3], 56
    %716 = vst.msk [vmem:[%s715] sm:$0xff] %vm170, %v713
    %717 = vst.msk [vmem:[#allocation10] sm:$0xff] %vm170, %v713
    %719 = vrot.lane.b32.xlu0 %v704, 96
    %v720 = vpop.permute.xlu0 %719
    %722 = vst.msk [vmem:[#allocation12] sm:$0xff] %vm170, %v720
    %v723 = vld [vmem:[#allocation3] sm:$0xff]
    %v724 = vld [vmem:[#allocation3 + $0x8] sm:$0xff]
    %v725 = vld [vmem:[#allocation3 + $0x10] sm:$0xff]
    %v726 = vld [vmem:[#allocation3 + $0x18] sm:$0xff]
    %v727 = vld [vmem:[#allocation3 + $0x20] sm:$0xff]
    %v728 = vld [vmem:[#allocation3 + $0x28] sm:$0xff]
    %v729 = vld [vmem:[#allocation3 + $0x30] sm:$0xff]
    %v730 = vld [vmem:[#allocation3 + $0x38] sm:$0xff]
    %v731 = vld [vmem:[%s4] sm:$0xff]
    %v732 = vld [vmem:[%s4 + $0x8] sm:$0xff]
    %v733 = vld [vmem:[%s4 + $0x10] sm:$0xff]
    %v734 = vld [vmem:[%s4 + $0x18] sm:$0xff]
    %v735 = vld [vmem:[%s5] sm:$0x1]
    %v737 = vperm.slane %v735, 0
    %v740 = vsel %vm170, %v723, 0
    %v743 = vsel %vm170, %v724, 0
    %v746 = vsel %vm170, %v725, 0
    %v749 = vsel %vm170, %v726, 0
    %v752 = vsel %vm170, %v727, 0
    %v755 = vsel %vm170, %v728, 0
    %v758 = vsel %vm170, %v729, 0
    %v761 = vsel %vm170, %v730, 0
    %763 = vmatpush.msra.mxu0 0.0
    %764 = vmatpush.msra.mxu0 0.0
    %765 = vmatpush.msra.mxu0 0.0
    %766 = vmatpush.msra.mxu0 0.0
    %767 = vmatpush.msra.mxu0 0.0
    %768 = vmatpush.msra.mxu0 0.0
    %769 = vmatpush.msra.mxu0 0.0
    %770 = vmatpush.msra.mxu0 0.0
    %771 = vmatpush.msra.mxu0 0.0
    %772 = vmatpush.msra.mxu0 0.0
    %773 = vmatpush.msra.mxu0 0.0
    %774 = vmatpush.msra.mxu0 0.0
    %775 = vmatpush.msra.mxu0 %v734
    %776 = vmatpush.msra.mxu0 %v733
    %777 = vmatpush.msra.mxu0 %v732
    %778 = vmatpush.msra.mxu0 %v731
    %779 = vmatmul.f32.gmra.mxu0 %v740
    %v780 = vpop.f32.mrf.mxu0
    %v781 = vadd.f32 %v737, %v780
    %782 = vmatmul.f32.gmra.mxu0 %v743
    %v783 = vpop.f32.mrf.mxu0
    %v784 = vadd.f32 %v737, %v783
    %785 = vmatmul.f32.gmra.mxu0 %v746
    %v786 = vpop.f32.mrf.mxu0
    %v787 = vadd.f32 %v737, %v786
    %788 = vmatmul.f32.gmra.mxu0 %v749
    %v789 = vpop.f32.mrf.mxu0
    %v790 = vadd.f32 %v737, %v789
    %791 = vmatmul.f32.gmra.mxu0 %v752
    %v792 = vpop.f32.mrf.mxu0
    %v793 = vadd.f32 %v737, %v792
    %794 = vmatmul.f32.gmra.mxu0 %v755
    %v795 = vpop.f32.mrf.mxu0
    %v796 = vadd.f32 %v737, %v795
    %797 = vmatmul.f32.gmra.mxu0 %v758
    %v798 = vpop.f32.mrf.mxu0
    %v799 = vadd.f32 %v737, %v798
    %800 = vmatmul.f32.gmra.mxu0 %v761
    %v801 = vpop.f32.mrf.mxu0
    %v802 = vadd.f32 %v737, %v801
    %803 = vdwg.mxu0
    %804 = vst [vmem:[#allocation9] sm:$0xff] %v781
    %805 = vst [vmem:[#allocation9 + $0x8] sm:$0xff] %v784
    %806 = vst [vmem:[#allocation9 + $0x10] sm:$0xff] %v787
    %807 = vst [vmem:[#allocation9 + $0x18] sm:$0xff] %v790
    %808 = vst [vmem:[#allocation9 + $0x20] sm:$0xff] %v793
    %809 = vst [vmem:[#allocation9 + $0x28] sm:$0xff] %v796
    %810 = vst [vmem:[#allocation9 + $0x30] sm:$0xff] %v799
    %811 = vst [vmem:[#allocation9 + $0x38] sm:$0xff] %v802
    // Predicated region
    $region46: #{tpu_custom_call.1} parent=1 // pred_check
      _
    $region47: #{tpu_custom_call.1} parent=1 // pred_check_branch
      %813 = sbr.rel (0) target = $region49
    $region48: #{tpu_custom_call.1} parent=1 // pred_region
      %815 = vsyncadd [#allocation6], 0
      %s816 = sshll.u32 [#allocation9], 4
      %s817 = int_to_ptr.vmem [resolvable:$true] %s816
      %s818 = sshll.u32 %s8, 4
      %s819 = int_to_ptr.hbm [resolvable:$true] %s818
      %824 = dma.vmem_to_hbm [thread:$0]  %s817, 1024, %s819, [#allocation6], 128, 128, 8
    $region49: #{tpu_custom_call.1} parent=1 // pred_fallthru
      _
    // Predicated region
    $region50: #{tpu_custom_call.1} parent=1 // pred_check
      _
    $region51: #{tpu_custom_call.1} parent=1 // pred_check_branch
      %826 = sbr.rel (0) target = $region53
    $region52: #{tpu_custom_call.1} parent=1 // pred_region
      %828 = vsyncadd [#allocation11], 0
      %s830 = sshll.u32 [#allocation10], 4
      %s831 = int_to_ptr.vmem [resolvable:$true] %s830
      %s832 = sshll.u32 %s9, 4
      %s833 = int_to_ptr.hbm [resolvable:$true] %s832
      %835 = dma.vmem_to_hbm [thread:$0]  %s831, 128, %s833, [#allocation11]
    $region53: #{tpu_custom_call.1} parent=1 // pred_fallthru
      _
    // Predicated region
    $region54: #{tpu_custom_call.1} parent=1 // pred_check
      _
    $region55: #{tpu_custom_call.1} parent=1 // pred_check_branch
      %837 = sbr.rel (0) target = $region57
    $region56: #{tpu_custom_call.1} parent=1 // pred_region
      %839 = vsyncadd [#allocation11], 0
      %s841 = sshll.u32 [#allocation12], 4
      %s842 = int_to_ptr.vmem [resolvable:$true] %s841
      %s843 = sshll.u32 %s10, 4
      %s844 = int_to_ptr.hbm [resolvable:$true] %s843
      %846 = dma.vmem_to_hbm [thread:$0]  %s842, 128, %s844, [#allocation11]
    $region57: #{tpu_custom_call.1} parent=1 // pred_fallthru
      _
    // Predicated region
    $region58: #{tpu_custom_call.1} parent=1 // pred_check
      _
    $region59: #{tpu_custom_call.1} parent=1 // pred_check_branch
      %848 = sbr.rel (0) target = $region61
    $region60: #{tpu_custom_call.1} parent=1 // pred_region
      %850 = dma.done [#allocation6], 1024
    $region61: #{tpu_custom_call.1} parent=1 // pred_fallthru
      _
    // Predicated region
    $region62: #{tpu_custom_call.1} parent=1 // pred_check
      _
    $region63: #{tpu_custom_call.1} parent=1 // pred_check_branch
      %852 = sbr.rel (0) target = $region65
    $region64: #{tpu_custom_call.1} parent=1 // pred_region
      %854 = dma.done [#allocation11], 128
    $region65: #{tpu_custom_call.1} parent=1 // pred_fallthru
      _
    // Predicated region
    $region66: #{tpu_custom_call.1} parent=1 // pred_check
      _
    $region67: #{tpu_custom_call.1} parent=1 // pred_check_branch
      %856 = sbr.rel (0) target = $region69
    $region68: #{tpu_custom_call.1} parent=1 // pred_region
      %858 = dma.done [#allocation11], 128
    $region69: #{tpu_custom_call.1} parent=1 // pred_fallthru
      _
    %859 = vsyncpa [#allocation5], 1
    %860 = vsyncpa [#allocation8], 1
    %861 = vsyncpa [#allocation6], 1
    %862 = vsyncpa [#allocation11], 1

</llo_original>
